<compile_context>
chip_gen: v7x
topology: tpu7x:2x2x1
jax: 0.10.0
libtpu: 0.0.40
codegen_flags: <defaults>
</compile_context>

<pallas_src>
import functools

import jax
import jax.numpy as jnp
from jax import lax
from jax.experimental import pallas as pl
from jax.experimental.pallas import tpu as pltpu


# Whole-input fast path: if the full input comfortably fits in VMEM, skip the
# grid/pipeline entirely (typical ConsensusModule inputs are ~100s of KiB).
_SINGLE_BLOCK_BYTES = 4 * 1024 * 1024

# Per-input-block byte budget for the tiled path.  Double-buffered inputs plus
# the f32 accumulator stay around ~13 MiB, well inside the explicit
# vmem_limit_bytes below and inside v7x's 64 MiB physical VMEM.
_MAX_TILE_BYTES = 6 * 1024 * 1024

# Lane-tile target (multiple of 128) when the feature dim is tiled.
_LANE_TILE = 1024


def _sublane_base(dtype) -> int:
    """Sublane packing granularity: 8 for 4-byte, 16 for 2-byte, 32 for 1-byte."""
    itemsize = jnp.dtype(dtype).itemsize
    return max(8, 32 // max(1, itemsize))


def _round_up(x: int, m: int) -> int:
    return ((x + m - 1) // m) * m


# ---------------------------------------------------------------------------
# Kernel bodies
# ---------------------------------------------------------------------------


def _mean_kernel_noacc(x_ref, o_ref, *, inv_t):
    """Whole reduction axis in one block: sum axis 1, scale, store."""
    x = x_ref[...].astype(jnp.float32)
    o_ref[...] = (jnp.sum(x, axis=1, keepdims=True) * inv_t).astype(o_ref.dtype)


def _mean_kernel_acc(x_ref, o_ref, acc_ref, *, inv_t, t_total, t_tile, mask_tail):
    """Reduction axis split across the trailing grid axis; f32 accumulator."""
    t = pl.program_id(2)

    @pl.when(t == 0)
    def _init():
        acc_ref[...] = jnp.zeros_like(acc_ref)

    x = x_ref[...].astype(jnp.float32)
    if mask_tail:
        # Zero the padded (out-of-bounds) rows of the last T block.  Cheap VPU
        # work; compute slots are otherwise idle in this mem-bound kernel.
        valid = t_total - t * t_tile
        row = lax.broadcasted_iota(jnp.int32, x.shape, 1)
        x = jnp.where(row < valid, x, 0.0)

    acc_ref[...] += jnp.sum(x, axis=1, keepdims=True)

    @pl.when(t == pl.num_programs(2) - 1)
    def _finalize():
        o_ref[...] = (acc_ref[...] * inv_t).astype(o_ref.dtype)


# ---------------------------------------------------------------------------
# Wrappers
# ---------------------------------------------------------------------------


def _cost(B, T, D, itemsize):
    return pl.CostEstimate(
        flops=B * T * D,
        transcendentals=0,
        bytes_accessed=(B * T * D + B * D) * itemsize,
    )


def _single_block_mean(x: jax.Array) -> jax.Array:
    """Grid-less path: whole (B, T, D) input and (B, 1, D) output live in VMEM."""
    B, T, D = x.shape
    itemsize = jnp.dtype(x.dtype).itemsize
    return pl.pallas_call(
        functools.partial(_mean_kernel_noacc, inv_t=1.0 / float(T)),
        out_shape=jax.ShapeDtypeStruct((B, 1, D), x.dtype),
        cost_estimate=_cost(B, T, D, itemsize),
    )(x)


def _tiled_mean(x: jax.Array, *, max_tile_bytes: int = _MAX_TILE_BYTES) -> jax.Array:
    """Tiled path: grid (B, D, T) with parallel/parallel/arbitrary semantics."""
    B, T, D = x.shape
    itemsize = jnp.dtype(x.dtype).itemsize
    sub = _sublane_base(x.dtype)

    # Lane tile: full D when it fits the lane target, else a multiple of 128
    # (cdiv grid; the OOB tail only feeds masked output stores).
    tD = D if D <= _LANE_TILE else _LANE_TILE

    # Sublane (reduction) tile: full T when it fits the per-block budget, else
    # a dtype-aware multiple of the sublane base (garbage in the padded T tail
    # is zeroed in-kernel).
    tT_budget = max(sub, max_tile_bytes // max(1, tD * itemsize))
    if T <= tT_budget:
        tT = T
    else:
        tT = max(sub, (tT_budget // sub) * sub)

    # Batch blocking: biggest that fits the budget (no single-TC megacore cap).
    bB_budget = max(1, max_tile_bytes // max(1, tT * tD * itemsize))
    bB = min(B, bB_budget)

    grid_B = pl.cdiv(B, bB)
    grid_D = pl.cdiv(D, tD)

    # Guarantee >= 2 parallel grid steps so both v7x TensorCores get work; on
    # single-TC v5e/v6e this costs at most one extra ~0.35 us grid step.
    if grid_B * grid_D == 1:
        if B > 1:
            bB = (B + 1) // 2
        elif D > 128 and tD == D:
            tD = _round_up((D + 1) // 2, 128)
        grid_B = pl.cdiv(B, bB)
        grid_D = pl.cdiv(D, tD)

    grid_T = pl.cdiv(T, tT)
    mask_tail = (T % tT) != 0
    inv_t = 1.0 / float(T)

    in_spec = pl.BlockSpec((bB, tT, tD), lambda b, d, t: (b, t, d))
    out_spec = pl.BlockSpec((bB, 1, tD), lambda b, d, t: (b, 0, d))

    if grid_T == 1:
        # Reduction fits one block: no accumulator, no init/finalize gates.
        kernel = functools.partial(_mean_kernel_noacc, inv_t=inv_t)
        scratch = []
        acc_bytes = 0
    else:
        kernel = functools.partial(
            _mean_kernel_acc, inv_t=inv_t, t_total=T, t_tile=tT, mask_tail=mask_tail
        )
        scratch = [pltpu.VMEM((bB, 1, tD), jnp.float32)]
        acc_bytes = bB * tD * 4

    # Explicit VMEM limit: 2x double-buffered input block + accumulator +
    # double-buffered output block + slack; clamped to stay well inside v7x's
    # 64 MiB physical VMEM.
    vmem_needed = (
        2 * (bB * tT * tD * itemsize) + acc_bytes + 2 * (bB * tD * itemsize) + (1 << 20)
    )
    vmem_limit = int(min(max(vmem_needed, 16 << 20), 40 << 20))

    return pl.pallas_call(
        kernel,
        out_shape=jax.ShapeDtypeStruct((B, 1, D), x.dtype),
        grid=(grid_B, grid_D, grid_T),
        in_specs=[in_spec],
        out_specs=out_spec,
        scratch_shapes=scratch,
        compiler_params=pltpu.CompilerParams(
            dimension_semantics=("parallel", "parallel", "arbitrary"),
            vmem_limit_bytes=vmem_limit,
        ),
        cost_estimate=_cost(B, T, D, itemsize),
    )(x)


def consensus_module(x: jax.Array, dim: int = 1) -> jax.Array:
    """Average consensus over `dim` (keepdim=True); default dim=1."""
    if not jnp.issubdtype(x.dtype, jnp.floating):
        # PyTorch's mean rejects integer dtypes; mirror that instead of
        # silently truncating.
        raise TypeError(f"consensus_module expects a floating dtype, got {x.dtype}")

    shape = x.shape
    dim = dim % x.ndim
    # Collapse to (pre, T, post) with zero-copy reshapes (native layout).
    pre = 1
    for s in shape[:dim]:
        pre *= s
    post = 1
    for s in shape[dim + 1:]:
        post *= s
    T = shape[dim]
    x3 = x.reshape(pre, T, post)

    total_bytes = pre * T * post * jnp.dtype(x.dtype).itemsize
    if total_bytes <= _SINGLE_BLOCK_BYTES:
        out3 = _single_block_mean(x3)
    else:
        out3 = _tiled_mean(x3)

    out_shape = shape[:dim] + (1,) + shape[dim + 1:]
    return out3.reshape(out_shape)


# TODO(synk): custom autograd backward (grad_output.expand(shape) / T) is not
# implemented; this covers the module's forward pass only.


if __name__ == "__main__":
    # Typical ConsensusModule layout: (batch, num_segments, features).
    B, T, D = 2, 8, 32
    x = jax.random.normal(jax.random.PRNGKey(0), (B, T, D), dtype=jnp.float32)
    out = jax.block_until_ready(consensus_module(x))
    ref = jnp.mean(x, axis=1, keepdims=True)
    assert out.shape == (B, 1, D), out.shape
    assert jnp.allclose(out, ref, atol=1e-5, rtol=1e-5), "mismatch (small single-block path)"

    # D >= 128, still small -> same single-block fast path.
    x2 = jax.random.normal(jax.random.PRNGKey(1), (2, 8, 128), dtype=jnp.float32)
    out2 = jax.block_until_ready(consensus_module(x2))
    ref2 = jnp.mean(x2, axis=1, keepdims=True)
    assert out2.shape == (2, 1, 128), out2.shape
    assert jnp.allclose(out2, ref2, atol=1e-5, rtol=1e-5), "mismatch (D=128 single-block path)"

    # Exercise the tiled no-accumulator path directly (T fits one block).
    x3 = jax.random.normal(jax.random.PRNGKey(2), (2, 8, 256), dtype=jnp.float32)
    out3 = jax.block_until_ready(_tiled_mean(x3))
    ref3 = jnp.mean(x3, axis=1, keepdims=True)
    assert jnp.allclose(out3, ref3, atol=1e-5, rtol=1e-5), "mismatch (tiled no-acc path)"

    # Exercise the tiled accumulator path with a masked T tail (tiny tile
    # budget forces the reduction axis across several grid steps; T=20 with
    # tT=8 leaves a partially-valid final block).
    x4 = jax.random.normal(jax.random.PRNGKey(3), (2, 20, 128), dtype=jnp.float32)
    out4 = jax.block_until_ready(_tiled_mean(x4, max_tile_bytes=8 * 128 * 4))
    ref4 = jnp.mean(x4, axis=1, keepdims=True)
    assert jnp.allclose(out4, ref4, atol=1e-5, rtol=1e-5), "mismatch (tiled acc + masked tail)"

    print("KERNEL_OK")
</pallas_src>

<mosaic_0001>
module attributes {stable_mosaic.version = 11 : i64} {
  func.func @_mean_kernel_noacc(%arg0: memref<2x8x32xf32, #tpu.memory_space<vmem>>, %arg1: memref<2x1x32xf32, #tpu.memory_space<vmem>>) attributes {dimension_semantics = [], scalar_prefetch = 0 : i64, scratch_operands = 0 : i64, tpu.core_type = #tpu.core_type<tc>} {
    %c0 = arith.constant 0 : index
    %c0_0 = arith.constant 0 : index
    %c0_1 = arith.constant 0 : index
    %0 = vector.load %arg0[%c0, %c0_0, %c0_1] : memref<2x8x32xf32, #tpu.memory_space<vmem>>, vector<2x8x32xf32>
    %cst = arith.constant dense<0.000000e+00> : vector<2x32xf32>
    %1 = vector.multi_reduction <add>, %0, %cst [1] : vector<2x8x32xf32> to vector<2x32xf32>
    %2 = vector.shape_cast %1 : vector<2x32xf32> to vector<2x1x32xf32>
    %cst_2 = arith.constant 1.250000e-01 : f32
    %3 = vector.broadcast %cst_2 : f32 to vector<2x1x32xf32>
    %4 = arith.mulf %2, %3 : vector<2x1x32xf32>
    %c0_3 = arith.constant 0 : index
    %c0_4 = arith.constant 0 : index
    %c0_5 = arith.constant 0 : index
    %5 = vector.load %arg1[%c0_3, %c0_4, %c0_5] : memref<2x1x32xf32, #tpu.memory_space<vmem>>, vector<2x1x32xf32>
    tpu.vector_store %arg1[%c0_3, %c0_4, %c0_5], %4 {strides = array<i32>} : memref<2x1x32xf32, #tpu.memory_space<vmem>>, vector<2x1x32xf32>,
    return
  }
}

</mosaic_0001>

<llo_original>
// kernel: tpu_custom_call.1
$region0: #{tpu_custom_call.1}
  #allocation0 [shape = 'u32[]', space=smem, size = 0x4, offset = 0x4, fixed_abs, tag = 'smem constant byte address 0x4 - core index']
  #allocation1 [shape = 'u32[144,128]{1,0:T(1,128)}', space=vmem, size = 0x12000, scoped, tag = 'internal scratch']
  %s0 = inlined_call_operand.hbm [shape: f32[2,8,32], index: 0, kind: input, shape index: {}]
  %s1 = inlined_call_operand.hbm [shape: f32[2,1,32], index: 1, kind: output, shape index: {}]
  %s2 = sld [smem:[#allocation0]]
  $region18: #{tpu_custom_call.1} parent=0
    _
  %s4 = ssub.s32 1, %s2
  %s5 = scalar_select 0, %s4, %s2
  $region1: #{tpu_custom_call.1} parent=0
    #allocation2 [shape = 'u8[8192]{0}', space=vmem, size = 0x2000, scoped, tag = 'input window, operand 0, single buffered']
    #allocation3 [shape = 's32[1]{0}', space=sflag, size = 0x4, scoped, tag = 'scoped memory for tpu_custom_call.1']
    #allocation4 [shape = 's32[1]{0}', space=sflag, size = 0x4, scoped, tag = 'scoped memory for tpu_custom_call.1']
    #allocation5 [shape = 'u8[1024]{0}', space=vmem, size = 0x400, scoped, tag = 'output window, operand 0, single buffered']
    %6 = vsyncpa [#allocation3], 0
    %7 = vsyncpa [#allocation4], 0
    // Predicated region
    $region2: #{tpu_custom_call.1} parent=1 // pred_check
      _
    $region3: #{tpu_custom_call.1} parent=1 // pred_check_branch
      %9 = sbr.rel (0) target = $region5
    $region4: #{tpu_custom_call.1} parent=1 // pred_region
      %s11 = ssub.s32 256, 256
      %12 = vsyncadd [#allocation3], %s11
      %s13 = sshll.u32 [#allocation2], 4
      %s14 = int_to_ptr.vmem [resolvable:$true] %s13
      %19 = dma.hbm_to_vmem [thread:$0]  %s0, 256, %s14, [#allocation3], 128, 128, 8
    $region5: #{tpu_custom_call.1} parent=1 // pred_fallthru
      _
    // Predicated region
    $region6: #{tpu_custom_call.1} parent=1 // pred_check
      _
    $region7: #{tpu_custom_call.1} parent=1 // pred_check_branch
      %21 = sbr.rel (0) target = $region9
    $region8: #{tpu_custom_call.1} parent=1 // pred_region
      %22 = dma.done [#allocation3], 256
    $region9: #{tpu_custom_call.1} parent=1 // pred_fallthru
      _
    %v23 = vld [vmem:[#allocation2] sm:$0xff]
    %v24 = vld [vmem:[#allocation2 + $0x8] sm:$0xff]
    %vm25 = vcmask 261120
    %v26 = vsel %vm25, %v23, 0.0
    %v27 = vrot.slane %v26, 4
    %v28 = vadd.f32 %v26, %v27
    %v29 = vrot.slane %v28, 2
    %v30 = vadd.f32 %v28, %v29
    %v31 = vrot.slane %v30, 1
    %v32 = vadd.f32 %v30, %v31
    %v33 = vsel %vm25, %v24, 0.0
    %v34 = vrot.slane %v33, 4
    %v35 = vadd.f32 %v33, %v34
    %v36 = vrot.slane %v35, 2
    %v37 = vadd.f32 %v35, %v36
    %v38 = vrot.slane %v37, 1
    %v39 = vadd.f32 %v37, %v38
    %v40 = vmul.f32 %v32, 0.125
    %v41 = vmul.f32 %v39, 0.125
    %vm42 = vcmask 253952
    %43 = vst.msk [vmem:[#allocation5] sm:$0x1] %vm42, %v40
    %44 = vst.msk [vmem:[#allocation5 + $0x1] sm:$0x1] %vm42, %v41
    // Predicated region
    $region10: #{tpu_custom_call.1} parent=1 // pred_check
      _
    $region11: #{tpu_custom_call.1} parent=1 // pred_check_branch
      %46 = sbr.rel (0) target = $region13
    $region12: #{tpu_custom_call.1} parent=1 // pred_region
      %s48 = ssub.s32 32, 32
      %49 = vsyncadd [#allocation4], %s48
      %s50 = sshll.u32 [#allocation5], 4
      %s51 = int_to_ptr.vmem [resolvable:$true] %s50
      %56 = dma.vmem_to_hbm [thread:$0]  %s51, 32, %s1, [#allocation4], 16, 16, 1
    $region13: #{tpu_custom_call.1} parent=1 // pred_fallthru
      _
    // Predicated region
    $region14: #{tpu_custom_call.1} parent=1 // pred_check
      _
    $region15: #{tpu_custom_call.1} parent=1 // pred_check_branch
      %58 = sbr.rel (0) target = $region17
    $region16: #{tpu_custom_call.1} parent=1 // pred_region
      %59 = dma.done [#allocation4], 32
    $region17: #{tpu_custom_call.1} parent=1 // pred_fallthru
      _
    %60 = vsyncpa [#allocation3], 1
    %61 = vsyncpa [#allocation4], 1

</llo_original>
